<compile_context>
chip_gen: v5e
topology: v5e:2x2
jax: 0.10.0
libtpu: 0.0.40
codegen_flags: <defaults>
</compile_context>

<pallas_src>
import jax
import jax.numpy as jnp
from jax import lax
from jax.experimental import pallas as pl
from jax.experimental.pallas import tpu as pltpu


def _round_up(x: int, m: int) -> int:
    return (x + m - 1) // m * m


def mlp_kernel(x_ref, w1_ref, b1_ref, w2_ref, b2_ref, w3t_ref, b3_ref, o_ref):
    # Layer 1: Linear(D -> 4D) + ReLU   (MXU, f32 accumulate; bias/ReLU in f32)
    h1 = jnp.dot(x_ref[...], w1_ref[...], preferred_element_type=jnp.float32)
    h1 = jnp.maximum(h1 + b1_ref[...], 0.0)                      # (tile, H1p) f32

    # Layer 2: Linear(4D -> 2D) + ReLU
    h2 = jnp.dot(h1.astype(w2_ref.dtype), w2_ref[...],
                 preferred_element_type=jnp.float32)
    h2 = jnp.maximum(h2 + b2_ref[...], 0.0)                      # (tile, H2p) f32

    # Layer 3: Linear(2D -> 1) computed transposed so the batch lands on the
    # lane axis:  scores = W3_rows @ h2^T  -> (8, tile); row 0 is the logits.
    # (W3 is pre-transposed & padded to (8, H2p) in the wrapper; rows 1..7 = 0.)
    scores = lax.dot_general(
        w3t_ref[...], h2.astype(w3t_ref.dtype),
        dimension_numbers=(((1,), (1,)), ((), ())),              # contract last dims
        preferred_element_type=jnp.float32)                      # (8, tile)
    logits = scores[0:1, :] + b3_ref[...]                        # (1, tile) f32

    # Lane-dense store: block is (1, 1, tile), batch on lanes.
    tile = o_ref.shape[-1]
    o_ref[...] = jax.nn.sigmoid(logits).reshape(1, 1, tile).astype(o_ref.dtype)


def mlp_forward(x, params, *, batch_tile=256, compute_dtype=jnp.bfloat16):
    """x: (B, D). params: dict of w1,b1,w2,b2,w3,b3 (PyTorch-equivalent layout)."""
    B, D = x.shape
    w1, b1 = params["w1"], params["b1"]
    w2, b2 = params["w2"], params["b2"]
    w3, b3 = params["w3"], params["b3"]
    H1, H2 = w1.shape[1], w2.shape[1]
    f32 = jnp.float32
    itemsize = jnp.dtype(compute_dtype).itemsize

    # ---- pad feature dims to multiples of 128 (full vregs / full MXU tiles) ----
    Dp, H1p, H2p = _round_up(D, 128), _round_up(H1, 128), _round_up(H2, 128)

    # ---- batch tiling: tile is a multiple of 128 to fill the MXU M dim ----
    assert batch_tile % 128 == 0 and batch_tile >= 128
    Bp = _round_up(B, 128)
    tile = min(batch_tile, Bp)
    Bp = _round_up(Bp, tile)
    grid = Bp // tile
    # NOTE(v7x): for large batches pick batch_tile so that `grid` is >= 2 (ideally
    # even) so the "parallel" batch axis shards across both TensorCores.

    # ---- zero-padded, compute-dtype operands (exact: pads contribute 0) ----
    xp = jnp.zeros((Bp, Dp), compute_dtype).at[:B, :D].set(x.astype(compute_dtype))
    w1p = jnp.zeros((Dp, H1p), compute_dtype).at[:D, :H1].set(w1.astype(compute_dtype))
    b1p = jnp.zeros((1, H1p), f32).at[:, :H1].set(b1.astype(f32))
    w2p = jnp.zeros((H1p, H2p), compute_dtype).at[:H1, :H2].set(w2.astype(compute_dtype))
    b2p = jnp.zeros((1, H2p), f32).at[:, :H2].set(b2.astype(f32))
    # Final-layer weight pre-transposed: row 0 of (8, H2p) holds w3^T, rest zeros.
    w3t = jnp.zeros((8, H2p), compute_dtype).at[0, :H2].set(w3[:, 0].astype(compute_dtype))
    b3p = b3.astype(f32).reshape(1, 1)

    # ---- VMEM budget (double-buffered weights + x tile + live intermediates) ----
    vmem_est = (
        2 * (w1p.size + w2p.size + w3t.size) * itemsize        # weights (x2 buffers)
        + 2 * (b1p.size + b2p.size + b3p.size) * 4             # biases  (x2 buffers)
        + 2 * tile * Dp * itemsize                             # x tile  (x2 buffers)
        + 2 * tile * 4                                         # out tile(x2 buffers)
        + tile * (H1p + H2p) * (4 + itemsize)                  # live h1/h2 + bf16 casts
    )
    vmem_limit = min(64 * 1024 * 1024, max(32 * 1024 * 1024, int(vmem_est * 3 // 2)))

    # ---- advisory cost estimate so XLA can overlap neighbours ----
    cost = pl.CostEstimate(
        flops=2 * Bp * (Dp * H1p + H1p * H2p + 8 * H2p),
        transcendentals=Bp,
        bytes_accessed=(xp.size * itemsize
                        + (w1p.size + w2p.size + w3t.size) * itemsize
                        + (b1p.size + b2p.size + b3p.size) * 4
                        + grid * tile * 4),
    )

    const = lambda i: (0, 0)  # weights/biases: resident, never re-fetched

    out = pl.pallas_call(
        mlp_kernel,
        out_shape=jax.ShapeDtypeStruct((grid, 1, tile), jnp.float32),
        grid_spec=pltpu.PrefetchScalarGridSpec(
            num_scalar_prefetch=0,
            grid=(grid,),
            in_specs=[
                pl.BlockSpec((tile, Dp), lambda i: (i, 0)),    # x batch tile
                pl.BlockSpec((Dp, H1p), const),                # w1
                pl.BlockSpec((1, H1p), const),                 # b1
                pl.BlockSpec((H1p, H2p), const),               # w2
                pl.BlockSpec((1, H2p), const),                 # b2
                pl.BlockSpec((8, H2p), const),                 # w3^T (padded rows)
                pl.BlockSpec((1, 1), const),                   # b3
            ],
            out_specs=pl.BlockSpec((1, 1, tile), lambda i: (i, 0, 0)),
        ),
        compiler_params=pltpu.CompilerParams(
            dimension_semantics=("parallel",),
            vmem_limit_bytes=vmem_limit,
        ),
        cost_estimate=cost,
    )(xp, w1p, b1p, w2p, b2p, w3t, b3p)

    # (grid, 1, tile) flattens in batch order; drop batch padding, restore (B, 1).
    return out.reshape(Bp, 1)[:B]


def init_params(key, in_features):
    """PyTorch-Linear-style init: U(-1/sqrt(fan_in), 1/sqrt(fan_in)); f32 master copy."""
    dims = [(in_features, 4 * in_features),
            (4 * in_features, 2 * in_features),
            (2 * in_features, 1)]
    params = {}
    for li, (fan_in, fan_out) in enumerate(dims, start=1):
        key, kw, kb = jax.random.split(key, 3)
        bound = 1.0 / jnp.sqrt(float(fan_in))
        params[f"w{li}"] = jax.random.uniform(
            kw, (fan_in, fan_out), jnp.float32, -bound, bound)
        params[f"b{li}"] = jax.random.uniform(
            kb, (1, fan_out), jnp.float32, -bound, bound)
    return params


if __name__ == "__main__":
    # Small shapes consistent with the module's forward (x is (batch, in_features)).
    IN_FEATURES = 32       # module default is 170; kept small for the demo
    BATCH = 16

    key = jax.random.PRNGKey(0)
    key, kx = jax.random.split(key)
    x = jax.random.normal(kx, (BATCH, IN_FEATURES), dtype=jnp.float32)
    params = init_params(key, IN_FEATURES)

    # Pure-JAX f32 reference.
    h1 = jnp.maximum(x @ params["w1"] + params["b1"], 0.0)
    h2 = jnp.maximum(h1 @ params["w2"] + params["b2"], 0.0)
    ref = jax.nn.sigmoid(h2 @ params["w3"] + params["b3"])

    # Optimized path (bf16 matmul inputs, f32 accumulation) — as used on v6e/v7x.
    out_bf16 = jax.block_until_ready(
        mlp_forward(x, params, batch_tile=256, compute_dtype=jnp.bfloat16))
    assert out_bf16.shape == (BATCH, 1)
    assert jnp.allclose(out_bf16, ref, atol=1e-2), "bf16 kernel mismatch"

    # Full-f32 path — bitwise-tight check of the kernel math / padding / layout.
    out_f32 = jax.block_until_ready(
        mlp_forward(x, params, batch_tile=256, compute_dtype=jnp.float32))
    assert jnp.allclose(out_f32, ref, atol=1e-5, rtol=1e-5), "f32 kernel mismatch"

    print("KERNEL_OK")
</pallas_src>

<mosaic_0001>
module attributes {stable_mosaic.version = 11 : i64} {
  func.func @mlp_kernel(%arg0: i32, %arg1: memref<128x128xbf16, #tpu.memory_space<vmem>>, %arg2: memref<128x128xbf16, #tpu.memory_space<vmem>>, %arg3: memref<1x128xf32, #tpu.memory_space<vmem>>, %arg4: memref<128x128xbf16, #tpu.memory_space<vmem>>, %arg5: memref<1x128xf32, #tpu.memory_space<vmem>>, %arg6: memref<8x128xbf16, #tpu.memory_space<vmem>>, %arg7: memref<1x1xf32, #tpu.memory_space<vmem>>, %arg8: memref<1x1x128xf32, #tpu.memory_space<vmem>>) attributes {dimension_semantics = [#tpu.dimension_semantics<parallel>], iteration_bounds = array<i64: 1>, scalar_prefetch = 0 : i64, scratch_operands = 0 : i64, tpu.core_type = #tpu.core_type<tc>, window_params = [{transform_indices = @transform_0, window_bounds = array<i64: 128, 128>}, {pipeline_mode = #tpu.pipeline_mode<synchronous>, transform_indices = @transform_1, window_bounds = array<i64: 128, 128>}, {pipeline_mode = #tpu.pipeline_mode<synchronous>, transform_indices = @transform_2, window_bounds = array<i64: 1, 128>}, {pipeline_mode = #tpu.pipeline_mode<synchronous>, transform_indices = @transform_3, window_bounds = array<i64: 128, 128>}, {pipeline_mode = #tpu.pipeline_mode<synchronous>, transform_indices = @transform_4, window_bounds = array<i64: 1, 128>}, {pipeline_mode = #tpu.pipeline_mode<synchronous>, transform_indices = @transform_5, window_bounds = array<i64: 8, 128>}, {pipeline_mode = #tpu.pipeline_mode<synchronous>, transform_indices = @transform_6, window_bounds = array<i64: 1, 1>}, {transform_indices = @transform_7, window_bounds = array<i64: 1, 1, 128>}]} {
    %c0 = arith.constant 0 : index
    %c0_0 = arith.constant 0 : index
    %0 = vector.load %arg1[%c0, %c0_0] : memref<128x128xbf16, #tpu.memory_space<vmem>>, vector<128x128xbf16>
    %c0_1 = arith.constant 0 : index
    %c0_2 = arith.constant 0 : index
    %1 = vector.load %arg2[%c0_1, %c0_2] : memref<128x128xbf16, #tpu.memory_space<vmem>>, vector<128x128xbf16>
    %cst = arith.constant dense<0.000000e+00> : vector<128x128xf32>
    %2 = tpu.matmul %0, %1, %cst {dimension_numbers = #tpu.dot_dimension_numbers<[1], [0], [0], [1], [0, 0, 1, 1], [], []>} : vector<128x128xbf16>, vector<128x128xbf16>, vector<128x128xf32> -> vector<128x128xf32>
    %c0_3 = arith.constant 0 : index
    %c0_4 = arith.constant 0 : index
    %3 = vector.load %arg3[%c0_3, %c0_4] : memref<1x128xf32, #tpu.memory_space<vmem>>, vector<1x128xf32>
    %4 = vector.broadcast %3 : vector<1x128xf32> to vector<128x128xf32>
    %5 = arith.addf %2, %4 : vector<128x128xf32>
    %cst_5 = arith.constant 0.000000e+00 : f32
    %6 = vector.broadcast %cst_5 : f32 to vector<128x128xf32>
    %7 = arith.maximumf %5, %6 : vector<128x128xf32>
    %8 = arith.truncf %7 : vector<128x128xf32> to vector<128x128xbf16>
    %c0_6 = arith.constant 0 : index
    %c0_7 = arith.constant 0 : index
    %9 = vector.load %arg4[%c0_6, %c0_7] : memref<128x128xbf16, #tpu.memory_space<vmem>>, vector<128x128xbf16>
    %cst_8 = arith.constant dense<0.000000e+00> : vector<128x128xf32>
    %10 = tpu.matmul %8, %9, %cst_8 {dimension_numbers = #tpu.dot_dimension_numbers<[1], [0], [0], [1], [0, 0, 1, 1], [], []>} : vector<128x128xbf16>, vector<128x128xbf16>, vector<128x128xf32> -> vector<128x128xf32>
    %c0_9 = arith.constant 0 : index
    %c0_10 = arith.constant 0 : index
    %11 = vector.load %arg5[%c0_9, %c0_10] : memref<1x128xf32, #tpu.memory_space<vmem>>, vector<1x128xf32>
    %12 = vector.broadcast %11 : vector<1x128xf32> to vector<128x128xf32>
    %13 = arith.addf %10, %12 : vector<128x128xf32>
    %cst_11 = arith.constant 0.000000e+00 : f32
    %14 = vector.broadcast %cst_11 : f32 to vector<128x128xf32>
    %15 = arith.maximumf %13, %14 : vector<128x128xf32>
    %c0_12 = arith.constant 0 : index
    %c0_13 = arith.constant 0 : index
    %16 = vector.load %arg6[%c0_12, %c0_13] : memref<8x128xbf16, #tpu.memory_space<vmem>>, vector<8x128xbf16>
    %17 = arith.truncf %15 : vector<128x128xf32> to vector<128x128xbf16>
    %cst_14 = arith.constant dense<0.000000e+00> : vector<8x128xf32>
    %18 = tpu.matmul %16, %17, %cst_14 {dimension_numbers = #tpu.dot_dimension_numbers<[1], [1], [0], [0], [0, 0, 1, 0], [], []>} : vector<8x128xbf16>, vector<128x128xbf16>, vector<8x128xf32> -> vector<8x128xf32>
    %19 = vector.extract_strided_slice %18 {offsets = [0, 0], sizes = [1, 128], strides = [1, 1]} : vector<8x128xf32> to vector<1x128xf32>
    %c0_15 = arith.constant 0 : index
    %c0_16 = arith.constant 0 : index
    %20 = vector.load %arg7[%c0_15, %c0_16] : memref<1x1xf32, #tpu.memory_space<vmem>>, vector<1x1xf32>
    %21 = vector.broadcast %20 : vector<1x1xf32> to vector<1x128xf32>
    %22 = arith.addf %19, %21 : vector<1x128xf32>
    %23 = arith.negf %22 : vector<1x128xf32>
    %24 = math.exp %23 : vector<1x128xf32>
    %cst_17 = arith.constant 1.000000e+00 : f32
    %25 = vector.broadcast %cst_17 : f32 to vector<1x128xf32>
    %26 = arith.addf %25, %24 : vector<1x128xf32>
    %27 = arith.divf %25, %26 : vector<1x128xf32>
    %28 = vector.shape_cast %27 : vector<1x128xf32> to vector<1x1x128xf32>
    %c0_18 = arith.constant 0 : index
    %c0_19 = arith.constant 0 : index
    %c0_20 = arith.constant 0 : index
    %29 = vector.load %arg8[%c0_18, %c0_19, %c0_20] : memref<1x1x128xf32, #tpu.memory_space<vmem>>, vector<1x1x128xf32>
    tpu.vector_store %arg8[%c0_18, %c0_19, %c0_20], %28 {strides = array<i32>} : memref<1x1x128xf32, #tpu.memory_space<vmem>>, vector<1x1x128xf32>,
    return
  }
  func.func @transform_0(%arg0: i32) -> (i32, i32) {
    %c0_i32 = arith.constant 0 : i32
    %c0_i32_0 = arith.constant 0 : i32
    return %arg0, %c0_i32 : i32, i32
  }
  func.func @transform_1(%arg0: i32) -> (i32, i32) {
    %c0_i32 = arith.constant 0 : i32
    %c0_i32_0 = arith.constant 0 : i32
    %c0_i32_1 = arith.constant 0 : i32
    return %c0_i32, %c0_i32_0 : i32, i32
  }
  func.func @transform_2(%arg0: i32) -> (i32, i32) {
    %c0_i32 = arith.constant 0 : i32
    %c0_i32_0 = arith.constant 0 : i32
    %c0_i32_1 = arith.constant 0 : i32
    return %c0_i32, %c0_i32_0 : i32, i32
  }
  func.func @transform_3(%arg0: i32) -> (i32, i32) {
    %c0_i32 = arith.constant 0 : i32
    %c0_i32_0 = arith.constant 0 : i32
    %c0_i32_1 = arith.constant 0 : i32
    return %c0_i32, %c0_i32_0 : i32, i32
  }
  func.func @transform_4(%arg0: i32) -> (i32, i32) {
    %c0_i32 = arith.constant 0 : i32
    %c0_i32_0 = arith.constant 0 : i32
    %c0_i32_1 = arith.constant 0 : i32
    return %c0_i32, %c0_i32_0 : i32, i32
  }
  func.func @transform_5(%arg0: i32) -> (i32, i32) {
    %c0_i32 = arith.constant 0 : i32
    %c0_i32_0 = arith.constant 0 : i32
    %c0_i32_1 = arith.constant 0 : i32
    return %c0_i32, %c0_i32_0 : i32, i32
  }
  func.func @transform_6(%arg0: i32) -> (i32, i32) {
    %c0_i32 = arith.constant 0 : i32
    %c0_i32_0 = arith.constant 0 : i32
    %c0_i32_1 = arith.constant 0 : i32
    return %c0_i32, %c0_i32_0 : i32, i32
  }
  func.func @transform_7(%arg0: i32) -> (i32, i32, i32) {
    %c0_i32 = arith.constant 0 : i32
    %c0_i32_0 = arith.constant 0 : i32
    %c0_i32_1 = arith.constant 0 : i32
    return %arg0, %c0_i32, %c0_i32_0 : i32, i32, i32
  }
}

</mosaic_0001>

<llo_original>
// kernel: tpu_custom_call.1
$region0: #{tpu_custom_call.1}
  #allocation0 [shape = 'u32[]', space=smem, size = 0x4, offset = 0x4, fixed_abs, tag = 'smem constant byte address 0x4 - core index']
  #allocation1 [shape = 'u32[72,128]{1,0:T(1,128)}', space=vmem, size = 0x9000, scoped, tag = 'internal scratch']
  #allocation2 [shape = 'f32[1,1]{1,0:T(1,128)S(1)}', space=vmem, size = 0x200, scoped, tag = 'scoped memory for tpu_custom_call.1']
  %s0 = inlined_call_operand.hbm [shape: bf16[128,128], index: 0, kind: input, shape index: {}]
  %s1 = inlined_call_operand.hbm [shape: bf16[128,128], index: 1, kind: input, shape index: {}]
  %s2 = inlined_call_operand.vmem [shape: f32[1,128], index: 2, kind: input, shape index: {}]
  %s3 = inlined_call_operand.hbm [shape: bf16[128,128], index: 3, kind: input, shape index: {}]
  %s4 = inlined_call_operand.vmem [shape: f32[1,128], index: 4, kind: input, shape index: {}]
  %s5 = inlined_call_operand.vmem [shape: bf16[8,128], index: 5, kind: input, shape index: {}]
  %s6 = inlined_call_operand.<no memory space> [shape: f32[1,1], index: 6, kind: input, shape index: {}]
  %s7 = inlined_call_operand.hbm [shape: f32[1,1,128], index: 7, kind: output, shape index: {}]
  %s8 = sld [smem:[#allocation0]]
  $region50: #{tpu_custom_call.1} parent=0
    _
  %s10 = ssub.s32 1, %s8
  %s11 = scalar_select 0, %s10, %s8
  %v12 = vstv %s6
  %13 = vst [vmem:[#allocation2] sm:$0x1] %v12
  $region1: #{tpu_custom_call.1} parent=0
    #allocation3 [shape = 'u8[32768]{0}', space=vmem, size = 0x8000, scoped, tag = 'input window, operand 0, single buffered']
    #allocation4 [shape = 's32[1]{0}', space=sflag, size = 0x4, scoped, tag = 'scoped memory for tpu_custom_call.1']
    #allocation5 [shape = 's32[1]{0}', space=sflag, size = 0x4, scoped, tag = 'scoped memory for tpu_custom_call.1']
    #allocation6 [shape = 'u8[32768]{0}', space=vmem, size = 0x8000, scoped, tag = 'input window, operand 1, single buffered']
    #allocation7 [shape = 's32[1]{0}', space=sflag, size = 0x4, scoped, tag = 'scoped memory for tpu_custom_call.1']
    #allocation8 [shape = 'u8[32768]{0}', space=vmem, size = 0x8000, scoped, tag = 'input window, operand 3, single buffered']
    #allocation9 [shape = 'u8[512]{0}', space=vmem, size = 0x400, scoped, tag = 'output window, operand 0, single buffered']
    %14 = vsyncpa [#allocation4], 0
    %15 = vsyncpa [#allocation7], 0
    %16 = vsyncpa [#allocation5], 0
    // Predicated region
    $region2: #{tpu_custom_call.1} parent=1 // pred_check
      _
    $region3: #{tpu_custom_call.1} parent=1 // pred_check_branch
      %18 = sbr.rel (0) target = $region5
    $region4: #{tpu_custom_call.1} parent=1 // pred_region
      %20 = vsyncadd [#allocation4], 0
      %s21 = sshll.u32 %s0, 4
      %s22 = int_to_ptr.hbm [resolvable:$true] %s21
      %s23 = sshll.u32 [#allocation3], 4
      %s24 = int_to_ptr.vmem [resolvable:$true] %s23
      %29 = dma.hbm_to_vmem [thread:$0]  %s22, 1024, %s24, [#allocation4], 64, 64, 4
    $region5: #{tpu_custom_call.1} parent=1 // pred_fallthru
      _
    // Predicated region
    $region6: #{tpu_custom_call.1} parent=1 // pred_check
      _
    $region7: #{tpu_custom_call.1} parent=1 // pred_check_branch
      %31 = sbr.rel (0) target = $region9
    $region8: #{tpu_custom_call.1} parent=1 // pred_region
      %33 = vsyncadd [#allocation7], 0
      %s34 = sshll.u32 %s1, 4
      %s35 = int_to_ptr.hbm [resolvable:$true] %s34
      %s36 = sshll.u32 [#allocation6], 4
      %s37 = int_to_ptr.vmem [resolvable:$true] %s36
      %42 = dma.hbm_to_vmem [thread:$0]  %s35, 1024, %s37, [#allocation7], 64, 64, 4
    $region9: #{tpu_custom_call.1} parent=1 // pred_fallthru
      _
    // Predicated region
    $region10: #{tpu_custom_call.1} parent=1 // pred_check
      _
    $region11: #{tpu_custom_call.1} parent=1 // pred_check_branch
      %44 = sbr.rel (0) target = $region13
    $region12: #{tpu_custom_call.1} parent=1 // pred_region
      _
    $region13: #{tpu_custom_call.1} parent=1 // pred_fallthru
      _
    // Predicated region
    $region14: #{tpu_custom_call.1} parent=1 // pred_check
      _
    $region15: #{tpu_custom_call.1} parent=1 // pred_check_branch
      %46 = sbr.rel (0) target = $region17
    $region16: #{tpu_custom_call.1} parent=1 // pred_region
      %48 = vsyncadd [#allocation7], 0
      %s49 = sshll.u32 %s3, 4
      %s50 = int_to_ptr.hbm [resolvable:$true] %s49
      %s51 = sshll.u32 [#allocation8], 4
      %s52 = int_to_ptr.vmem [resolvable:$true] %s51
      %57 = dma.hbm_to_vmem [thread:$0]  %s50, 1024, %s52, [#allocation7], 64, 64, 4
    $region17: #{tpu_custom_call.1} parent=1 // pred_fallthru
      _
    // Predicated region
    $region18: #{tpu_custom_call.1} parent=1 // pred_check
      _
    $region19: #{tpu_custom_call.1} parent=1 // pred_check_branch
      %59 = sbr.rel (0) target = $region21
    $region20: #{tpu_custom_call.1} parent=1 // pred_region
      _
    $region21: #{tpu_custom_call.1} parent=1 // pred_fallthru
      _
    // Predicated region
    $region22: #{tpu_custom_call.1} parent=1 // pred_check
      _
    $region23: #{tpu_custom_call.1} parent=1 // pred_check_branch
      %61 = sbr.rel (0) target = $region25
    $region24: #{tpu_custom_call.1} parent=1 // pred_region
      _
    $region25: #{tpu_custom_call.1} parent=1 // pred_fallthru
      _
    // Predicated region
    $region26: #{tpu_custom_call.1} parent=1 // pred_check
      _
    $region27: #{tpu_custom_call.1} parent=1 // pred_check_branch
      %63 = sbr.rel (0) target = $region29
    $region28: #{tpu_custom_call.1} parent=1 // pred_region
      _
    $region29: #{tpu_custom_call.1} parent=1 // pred_fallthru
      _
    // Predicated region
    $region30: #{tpu_custom_call.1} parent=1 // pred_check
      _
    $region31: #{tpu_custom_call.1} parent=1 // pred_check_branch
      %65 = sbr.rel (0) target = $region33
    $region32: #{tpu_custom_call.1} parent=1 // pred_region
      %67 = dma.done [#allocation4], 1024
    $region33: #{tpu_custom_call.1} parent=1 // pred_fallthru
      _
    // Predicated region
    $region34: #{tpu_custom_call.1} parent=1 // pred_check
      _
    $region35: #{tpu_custom_call.1} parent=1 // pred_check_branch
      %69 = sbr.rel (0) target = $region37
    $region36: #{tpu_custom_call.1} parent=1 // pred_region
      %71 = dma.done [#allocation7], 1024
    $region37: #{tpu_custom_call.1} parent=1 // pred_fallthru
      _
    // Predicated region
    $region38: #{tpu_custom_call.1} parent=1 // pred_check
      _
    $region39: #{tpu_custom_call.1} parent=1 // pred_check_branch
      %73 = sbr.rel (0) target = $region41
    $region40: #{tpu_custom_call.1} parent=1 // pred_region
      %75 = dma.done [#allocation7], 1024
    $region41: #{tpu_custom_call.1} parent=1 // pred_fallthru
      _
    %v76 = vld [vmem:[#allocation3] sm:$0xf]
    %v77 = vld [vmem:[#allocation3 + $0x4] sm:$0xf]
    %v78 = vld [vmem:[#allocation3 + $0x8] sm:$0xf]
    %v79 = vld [vmem:[#allocation3 + $0xc] sm:$0xf]
    %v80 = vld [vmem:[#allocation3 + $0x10] sm:$0xf]
    %v81 = vld [vmem:[#allocation3 + $0x14] sm:$0xf]
    %v82 = vld [vmem:[#allocation3 + $0x18] sm:$0xf]
    %v83 = vld [vmem:[#allocation3 + $0x1c] sm:$0xf]
    %v84 = vld [vmem:[#allocation3 + $0x20] sm:$0xf]
    %v85 = vld [vmem:[#allocation3 + $0x24] sm:$0xf]
    %v86 = vld [vmem:[#allocation3 + $0x28] sm:$0xf]
    %v87 = vld [vmem:[#allocation3 + $0x2c] sm:$0xf]
    %v88 = vld [vmem:[#allocation3 + $0x30] sm:$0xf]
    %v89 = vld [vmem:[#allocation3 + $0x34] sm:$0xf]
    %v90 = vld [vmem:[#allocation3 + $0x38] sm:$0xf]
    %v91 = vld [vmem:[#allocation3 + $0x3c] sm:$0xf]
    %v92 = vld [vmem:[#allocation6] sm:$0xf]
    %v93 = vld [vmem:[#allocation6 + $0x4] sm:$0xf]
    %v94 = vld [vmem:[#allocation6 + $0x8] sm:$0xf]
    %v95 = vld [vmem:[#allocation6 + $0xc] sm:$0xf]
    %v96 = vld [vmem:[#allocation6 + $0x10] sm:$0xf]
    %v97 = vld [vmem:[#allocation6 + $0x14] sm:$0xf]
    %v98 = vld [vmem:[#allocation6 + $0x18] sm:$0xf]
    %v99 = vld [vmem:[#allocation6 + $0x1c] sm:$0xf]
    %v100 = vld [vmem:[#allocation6 + $0x20] sm:$0xf]
    %v101 = vld [vmem:[#allocation6 + $0x24] sm:$0xf]
    %v102 = vld [vmem:[#allocation6 + $0x28] sm:$0xf]
    %v103 = vld [vmem:[#allocation6 + $0x2c] sm:$0xf]
    %v104 = vld [vmem:[#allocation6 + $0x30] sm:$0xf]
    %v105 = vld [vmem:[#allocation6 + $0x34] sm:$0xf]
    %v106 = vld [vmem:[#allocation6 + $0x38] sm:$0xf]
    %v107 = vld [vmem:[#allocation6 + $0x3c] sm:$0xf]
    %v108 = vld [vmem:[%s2] sm:$0x1]
    %v110 = vperm.slane %v108, 0
    %v128 = vunpack.c.l.b16 %v76
    %v129 = vunpack.c.l.b16 %v77
    %v130 = vunpack.c.l.b16 %v78
    %v131 = vunpack.c.l.b16 %v79
    %v132 = vunpack.c.l.b16 %v80
    %v133 = vunpack.c.l.b16 %v81
    %v134 = vunpack.c.l.b16 %v82
    %v135 = vunpack.c.l.b16 %v83
    %v136 = vunpack.c.l.b16 %v84
    %v137 = vunpack.c.l.b16 %v85
    %v138 = vunpack.c.l.b16 %v86
    %v139 = vunpack.c.l.b16 %v87
    %v140 = vunpack.c.l.b16 %v88
    %v141 = vunpack.c.l.b16 %v89
    %v142 = vunpack.c.l.b16 %v90
    %v143 = vunpack.c.l.b16 %v91
    %v144 = vpack.c.b16 %v129, %v128
    %v145 = vpack.c.b16 %v131, %v130
    %v146 = vpack.c.b16 %v133, %v132
    %v147 = vpack.c.b16 %v135, %v134
    %v148 = vpack.c.b16 %v137, %v136
    %v149 = vpack.c.b16 %v139, %v138
    %v150 = vpack.c.b16 %v141, %v140
    %v151 = vpack.c.b16 %v143, %v142
    %v176 = vunpack.c.l.b16 %v92
    %v177 = vunpack.c.l.b16 %v93
    %v178 = vunpack.c.l.b16 %v94
    %v179 = vunpack.c.l.b16 %v95
    %v180 = vunpack.c.l.b16 %v96
    %v181 = vunpack.c.l.b16 %v97
    %v182 = vunpack.c.l.b16 %v98
    %v183 = vunpack.c.l.b16 %v99
    %v184 = vunpack.c.l.b16 %v100
    %v185 = vunpack.c.l.b16 %v101
    %v186 = vunpack.c.l.b16 %v102
    %v187 = vunpack.c.l.b16 %v103
    %v188 = vunpack.c.l.b16 %v104
    %v189 = vunpack.c.l.b16 %v105
    %v190 = vunpack.c.l.b16 %v106
    %v191 = vunpack.c.l.b16 %v107
    %v192 = vpack.c.b16 %v177, %v176
    %v193 = vpack.c.b16 %v179, %v178
    %v194 = vpack.c.b16 %v181, %v180
    %v195 = vpack.c.b16 %v183, %v182
    %v196 = vpack.c.b16 %v185, %v184
    %v197 = vpack.c.b16 %v187, %v186
    %v198 = vpack.c.b16 %v189, %v188
    %v199 = vpack.c.b16 %v191, %v190
    %208 = vmatpush.bf16.msra.mxu0 %v199
    %209 = vmatpush.bf16.msra.mxu0 %v198
    %210 = vmatpush.bf16.msra.mxu0 %v197
    %211 = vmatpush.bf16.msra.mxu0 %v196
    %212 = vmatpush.bf16.msra.mxu0 %v195
    %213 = vmatpush.bf16.msra.mxu0 %v194
    %214 = vmatpush.bf16.msra.mxu0 %v193
    %215 = vmatpush.bf16.msra.mxu0 %v192
    %216 = vmatmul.bf16.gmra.mxu0 %v144
    %v217 = vpop.f32.mrf.mxu0
    %v218 = vadd.f32 %v110, %v217
    %v219 = vpop.f32.mrf.mxu0
    %v220 = vadd.f32 %v110, %v219
    %221 = vmatmul.bf16.gmra.mxu0 %v145
    %v222 = vpop.f32.mrf.mxu0
    %v223 = vadd.f32 %v110, %v222
    %v224 = vpop.f32.mrf.mxu0
    %v225 = vadd.f32 %v110, %v224
    %226 = vmatmul.bf16.gmra.mxu0 %v146
    %v227 = vpop.f32.mrf.mxu0
    %v228 = vadd.f32 %v110, %v227
    %v229 = vpop.f32.mrf.mxu0
    %v230 = vadd.f32 %v110, %v229
    %231 = vmatmul.bf16.gmra.mxu0 %v147
    %v232 = vpop.f32.mrf.mxu0
    %v233 = vadd.f32 %v110, %v232
    %v234 = vpop.f32.mrf.mxu0
    %v235 = vadd.f32 %v110, %v234
    %236 = vmatmul.bf16.gmra.mxu0 %v148
    %v237 = vpop.f32.mrf.mxu0
    %v238 = vadd.f32 %v110, %v237
    %v239 = vpop.f32.mrf.mxu0
    %v240 = vadd.f32 %v110, %v239
    %241 = vmatmul.bf16.gmra.mxu0 %v149
    %v242 = vpop.f32.mrf.mxu0
    %v243 = vadd.f32 %v110, %v242
    %v244 = vpop.f32.mrf.mxu0
    %v245 = vadd.f32 %v110, %v244
    %246 = vmatmul.bf16.gmra.mxu0 %v150
    %v247 = vpop.f32.mrf.mxu0
    %v248 = vadd.f32 %v110, %v247
    %v249 = vpop.f32.mrf.mxu0
    %v250 = vadd.f32 %v110, %v249
    %251 = vmatmul.bf16.gmra.mxu0 %v151
    %v252 = vpop.f32.mrf.mxu0
    %v253 = vadd.f32 %v110, %v252
    %v254 = vpop.f32.mrf.mxu0
    %v255 = vadd.f32 %v110, %v254
    %256 = vdwg.mxu0
    %v257 = vmax.f32 %v218, 0.0
    %v258 = vmax.f32 %v220, 0.0
    %v259 = vmax.f32 %v223, 0.0
    %v260 = vmax.f32 %v225, 0.0
    %v261 = vmax.f32 %v228, 0.0
    %v262 = vmax.f32 %v230, 0.0
    %v263 = vmax.f32 %v233, 0.0
    %v264 = vmax.f32 %v235, 0.0
    %v265 = vmax.f32 %v238, 0.0
    %v266 = vmax.f32 %v240, 0.0
    %v267 = vmax.f32 %v243, 0.0
    %v268 = vmax.f32 %v245, 0.0
    %v269 = vmax.f32 %v248, 0.0
    %v270 = vmax.f32 %v250, 0.0
    %v271 = vmax.f32 %v253, 0.0
    %v272 = vmax.f32 %v255, 0.0
    %v273 = vpack.c.bf16 %v258, %v257
    %v274 = vpack.c.bf16 %v260, %v259
    %v275 = vpack.c.bf16 %v262, %v261
    %v276 = vpack.c.bf16 %v264, %v263
    %v277 = vpack.c.bf16 %v266, %v265
    %v278 = vpack.c.bf16 %v268, %v267
    %v279 = vpack.c.bf16 %v270, %v269
    %v280 = vpack.c.bf16 %v272, %v271
    %v281 = vld [vmem:[#allocation8] sm:$0xf]
    %v282 = vld [vmem:[#allocation8 + $0x4] sm:$0xf]
    %v283 = vld [vmem:[#allocation8 + $0x8] sm:$0xf]
    %v284 = vld [vmem:[#allocation8 + $0xc] sm:$0xf]
    %v285 = vld [vmem:[#allocation8 + $0x10] sm:$0xf]
    %v286 = vld [vmem:[#allocation8 + $0x14] sm:$0xf]
    %v287 = vld [vmem:[#allocation8 + $0x18] sm:$0xf]
    %v288 = vld [vmem:[#allocation8 + $0x1c] sm:$0xf]
    %v289 = vld [vmem:[#allocation8 + $0x20] sm:$0xf]
    %v290 = vld [vmem:[#allocation8 + $0x24] sm:$0xf]
    %v291 = vld [vmem:[#allocation8 + $0x28] sm:$0xf]
    %v292 = vld [vmem:[#allocation8 + $0x2c] sm:$0xf]
    %v293 = vld [vmem:[#allocation8 + $0x30] sm:$0xf]
    %v294 = vld [vmem:[#allocation8 + $0x34] sm:$0xf]
    %v295 = vld [vmem:[#allocation8 + $0x38] sm:$0xf]
    %v296 = vld [vmem:[#allocation8 + $0x3c] sm:$0xf]
    %v297 = vld [vmem:[%s4] sm:$0x1]
    %v299 = vperm.slane %v297, 0
    %v317 = vunpack.c.l.b16 %v281
    %v318 = vunpack.c.l.b16 %v282
    %v319 = vunpack.c.l.b16 %v283
    %v320 = vunpack.c.l.b16 %v284
    %v321 = vunpack.c.l.b16 %v285
    %v322 = vunpack.c.l.b16 %v286
    %v323 = vunpack.c.l.b16 %v287
    %v324 = vunpack.c.l.b16 %v288
    %v325 = vunpack.c.l.b16 %v289
    %v326 = vunpack.c.l.b16 %v290
    %v327 = vunpack.c.l.b16 %v291
    %v328 = vunpack.c.l.b16 %v292
    %v329 = vunpack.c.l.b16 %v293
    %v330 = vunpack.c.l.b16 %v294
    %v331 = vunpack.c.l.b16 %v295
    %v332 = vunpack.c.l.b16 %v296
    %v333 = vpack.c.b16 %v318, %v317
    %v334 = vpack.c.b16 %v320, %v319
    %v335 = vpack.c.b16 %v322, %v321
    %v336 = vpack.c.b16 %v324, %v323
    %v337 = vpack.c.b16 %v326, %v325
    %v338 = vpack.c.b16 %v328, %v327
    %v339 = vpack.c.b16 %v330, %v329
    %v340 = vpack.c.b16 %v332, %v331
    %349 = vmatpush.bf16.msra.mxu0 %v340
    %350 = vmatpush.bf16.msra.mxu0 %v339
    %351 = vmatpush.bf16.msra.mxu0 %v338
    %352 = vmatpush.bf16.msra.mxu0 %v337
    %353 = vmatpush.bf16.msra.mxu0 %v336
    %354 = vmatpush.bf16.msra.mxu0 %v335
    %355 = vmatpush.bf16.msra.mxu0 %v334
    %356 = vmatpush.bf16.msra.mxu0 %v333
    %357 = vmatmul.bf16.gmra.mxu0 %v273
    %v358 = vpop.f32.mrf.mxu0
    %v359 = vadd.f32 %v299, %v358
    %v360 = vpop.f32.mrf.mxu0
    %v361 = vadd.f32 %v299, %v360
    %362 = vmatmul.bf16.gmra.mxu0 %v274
    %v363 = vpop.f32.mrf.mxu0
    %v364 = vadd.f32 %v299, %v363
    %v365 = vpop.f32.mrf.mxu0
    %v366 = vadd.f32 %v299, %v365
    %367 = vmatmul.bf16.gmra.mxu0 %v275
    %v368 = vpop.f32.mrf.mxu0
    %v369 = vadd.f32 %v299, %v368
    %v370 = vpop.f32.mrf.mxu0
    %v371 = vadd.f32 %v299, %v370
    %372 = vmatmul.bf16.gmra.mxu0 %v276
    %v373 = vpop.f32.mrf.mxu0
    %v374 = vadd.f32 %v299, %v373
    %v375 = vpop.f32.mrf.mxu0
    %v376 = vadd.f32 %v299, %v375
    %377 = vmatmul.bf16.gmra.mxu0 %v277
    %v378 = vpop.f32.mrf.mxu0
    %v379 = vadd.f32 %v299, %v378
    %v380 = vpop.f32.mrf.mxu0
    %v381 = vadd.f32 %v299, %v380
    %382 = vmatmul.bf16.gmra.mxu0 %v278
    %v383 = vpop.f32.mrf.mxu0
    %v384 = vadd.f32 %v299, %v383
    %v385 = vpop.f32.mrf.mxu0
    %v386 = vadd.f32 %v299, %v385
    %387 = vmatmul.bf16.gmra.mxu0 %v279
    %v388 = vpop.f32.mrf.mxu0
    %v389 = vadd.f32 %v299, %v388
    %v390 = vpop.f32.mrf.mxu0
    %v391 = vadd.f32 %v299, %v390
    %392 = vmatmul.bf16.gmra.mxu0 %v280
    %v393 = vpop.f32.mrf.mxu0
    %v394 = vadd.f32 %v299, %v393
    %v395 = vpop.f32.mrf.mxu0
    %v396 = vadd.f32 %v299, %v395
    %397 = vdwg.mxu0
    %v398 = vmax.f32 %v359, 0.0
    %v399 = vmax.f32 %v361, 0.0
    %v400 = vmax.f32 %v364, 0.0
    %v401 = vmax.f32 %v366, 0.0
    %v402 = vmax.f32 %v369, 0.0
    %v403 = vmax.f32 %v371, 0.0
    %v404 = vmax.f32 %v374, 0.0
    %v405 = vmax.f32 %v376, 0.0
    %v406 = vmax.f32 %v379, 0.0
    %v407 = vmax.f32 %v381, 0.0
    %v408 = vmax.f32 %v384, 0.0
    %v409 = vmax.f32 %v386, 0.0
    %v410 = vmax.f32 %v389, 0.0
    %v411 = vmax.f32 %v391, 0.0
    %v412 = vmax.f32 %v394, 0.0
    %v413 = vmax.f32 %v396, 0.0
    %v414 = vld [vmem:[%s5] sm:$0xf]
    %v415 = vpack.c.bf16 %v399, %v398
    %v416 = vpack.c.bf16 %v401, %v400
    %v417 = vpack.c.bf16 %v403, %v402
    %v418 = vpack.c.bf16 %v405, %v404
    %v419 = vpack.c.bf16 %v407, %v406
    %v420 = vpack.c.bf16 %v409, %v408
    %v421 = vpack.c.bf16 %v411, %v410
    %v422 = vpack.c.bf16 %v413, %v412
    %423 = vmatpush.bf16.xpose.msra.mxu0 %v422
    %424 = vmatpush.bf16.xpose.msra.mxu0 %v421
    %425 = vmatpush.bf16.xpose.msra.mxu0 %v420
    %426 = vmatpush.bf16.xpose.msra.mxu0 %v419
    %427 = vmatpush.bf16.xpose.msra.mxu0 %v418
    %428 = vmatpush.bf16.xpose.msra.mxu0 %v417
    %429 = vmatpush.bf16.xpose.msra.mxu0 %v416
    %430 = vmatpush.bf16.xpose.msra.mxu0 %v415
    %431 = vmatmul.bf16.gmra.mxu0 %v414
    %v432 = vpop.f32.mrf.mxu0
    %v433 = vadd.f32 0.0, %v432
    %v434 = vpop.f32.mrf.mxu0
    %435 = vdwg.mxu0
    %v436 = vld [vmem:[#allocation2] sm:$0x1]
    %438 = vset.pattern.permute.xlu0 0
    %439 = vperm.xlu0 %438, %v436
    %v440 = vpop.permute.xlu0 %439
    %v442 = vperm.slane %v440, 0
    %v443 = vadd.f32 %v433, %v442
    %v444 = vxor.u32 %v443, 2147483648
    %v445 = vmul.f32 %v444, 1.442695
    %v446 = vpow.pop %v445
    %v447 = vadd.f32 %v446, 1.0
    %v448 = vrcp.pop %v447
    %v449 = vmul.f32 %v447, %v448
    %v450 = vsub.f32 1.0, %v449
    %v451 = vmul.f32 %v448, %v450
    %v452 = vadd.f32 %v448, %v451
    %vm453 = vweird.f32 %v447
    %vm454 = vweird.f32 %v448
    %vm455 = vmor %vm453, %vm454
    %v456 = vsel %vm455, %v448, %v452
    %v457 = vand.u32 2147483647, %v447
    %vm458 = vcmp.eq.f32.partialorder %v457, 8.507059e+37
    %v459 = vand.u32 %v447, 2147483648
    %v460 = vor.u32 1.1754944e-38, %v459
    %v461 = vsel %vm458, %v460, %v456
    %v462 = vmul.f32 1.0, %v461
    %463 = vst [vmem:[#allocation9] sm:$0x1] %v462
    // Predicated region
    $region42: #{tpu_custom_call.1} parent=1 // pred_check
      _
    $region43: #{tpu_custom_call.1} parent=1 // pred_check_branch
      %465 = sbr.rel (0) target = $region45
    $region44: #{tpu_custom_call.1} parent=1 // pred_region
      %467 = vsyncadd [#allocation5], 0
      %s469 = sshll.u32 [#allocation9], 4
      %s470 = int_to_ptr.vmem [resolvable:$true] %s469
      %s471 = sshll.u32 %s7, 4
      %s472 = int_to_ptr.hbm [resolvable:$true] %s471
      %474 = dma.vmem_to_hbm [thread:$0]  %s470, 16, %s472, [#allocation5]
    $region45: #{tpu_custom_call.1} parent=1 // pred_fallthru
      _
    // Predicated region
    $region46: #{tpu_custom_call.1} parent=1 // pred_check
      _
    $region47: #{tpu_custom_call.1} parent=1 // pred_check_branch
      %476 = sbr.rel (0) target = $region49
    $region48: #{tpu_custom_call.1} parent=1 // pred_region
      %478 = dma.done [#allocation5], 16
    $region49: #{tpu_custom_call.1} parent=1 // pred_fallthru
      _
    %479 = vsyncpa [#allocation4], 1
    %480 = vsyncpa [#allocation7], 1
    %481 = vsyncpa [#allocation5], 1

</llo_original>
